<compile_context>
chip_gen: v5e
topology: v5e:2x2
jax: 0.10.0
libtpu: 0.0.40
codegen_flags: <defaults>
</compile_context>

<pallas_src>
import math

import jax
import jax.numpy as jnp
from jax.experimental import pallas as pl
from jax.experimental.pallas import tpu as pltpu


def _round_up(n, m):
    return ((n + m - 1) // m) * m


def _choose_row_tile(m_rows, max_tile=512):
    """Largest row tile that keeps per-step work big, while leaving >= 2 grid
    steps so the grid can be split across v7x's two TensorCores."""
    tile = min(max_tile, _round_up(m_rows, 8))
    if m_rows > 8:
        tile = min(tile, max(8, _round_up((m_rows + 1) // 2, 8)))
    return tile


# ----------------------------------------------------------------------------
# Kernel: one (TM, in_features) row tile -> fc1 -> exact GELU -> fc2
# ----------------------------------------------------------------------------
def mlp_kernel(x_ref, w1_ref, b1_ref, w2_ref, b2_ref, o_ref):
    mm_dtype = w1_ref.dtype                     # bf16 (perf path) or f32
    x = x_ref[...]                              # (TM, in_features) fp32

    # fc1: MXU matmul with fp32 accumulation, fp32 bias add on the VPU
    h = jnp.dot(x.astype(mm_dtype), w1_ref[...],
                preferred_element_type=jnp.float32) + b1_ref[...]

    # exact GELU (erf) in fp32 -- matches torch.nn.GELU() default
    h = 0.5 * h * (1.0 + jax.lax.erf(h * (1.0 / math.sqrt(2.0))))

    # fc2: MXU matmul with fp32 accumulation, fp32 bias add
    out = jnp.dot(h.astype(mm_dtype), w2_ref[...],
                  preferred_element_type=jnp.float32) + b2_ref[...]

    # single lane-dense store of the whole (TM, out_features) tile
    o_ref[...] = out.astype(o_ref.dtype)


# ----------------------------------------------------------------------------
# Wrapper
# ----------------------------------------------------------------------------
def mlp_pallas(x, params, *, matmul_dtype=jnp.bfloat16, row_tile=None):
    """Forward of torch Mlp: fc2(GELU(fc1(x))).  Dropout (p=0.0) is identity.

    x: (..., in_features) float32.  Returns (..., out_features) float32.
    """
    in_features = params['fc1_w'].shape[0]
    hidden_features = params['fc1_w'].shape[1]
    out_features = params['fc2_w'].shape[1]
    assert x.shape[-1] == in_features

    lead = x.shape[:-1]
    m = 1
    for d in lead:
        m *= d
    x2 = x.reshape(m, in_features).astype(jnp.float32)

    tm = row_tile or _choose_row_tile(m)
    m_pad = _round_up(m, tm)
    if m_pad != m:
        x2 = jnp.pad(x2, ((0, m_pad - m), (0, 0)))
    grid = (m_pad // tm,)

    # Cast matmul weights once on the wrapper side (halves weight DMA bytes on
    # the bf16 path); biases stay fp32 for the VPU adds.
    w1 = params['fc1_w'].astype(matmul_dtype)
    w2 = params['fc2_w'].astype(matmul_dtype)
    b1 = params['fc1_b'].reshape(1, hidden_features).astype(jnp.float32)
    b2 = params['fc2_b'].reshape(1, out_features).astype(jnp.float32)

    out2 = pl.pallas_call(
        mlp_kernel,
        out_shape=jax.ShapeDtypeStruct((m_pad, out_features), jnp.float32),
        grid=grid,
        in_specs=[
            pl.BlockSpec((tm, in_features), lambda i: (i, 0)),   # row tile
            pl.BlockSpec(w1.shape, lambda i: (0, 0)),            # full weights
            pl.BlockSpec(b1.shape, lambda i: (0, 0)),
            pl.BlockSpec(w2.shape, lambda i: (0, 0)),
            pl.BlockSpec(b2.shape, lambda i: (0, 0)),
        ],
        out_specs=pl.BlockSpec((tm, out_features), lambda i: (i, 0)),
        compiler_params=pltpu.CompilerParams(
            dimension_semantics=("parallel",)),
    )(x2, w1, b1, w2, b2)

    if m_pad != m:
        out2 = out2[:m]
    return out2.reshape(*lead, out_features)


# ----------------------------------------------------------------------------
# Pure-JAX reference (fp32, high-precision matmuls) for correctness check
# ----------------------------------------------------------------------------
def mlp_reference(x, params):
    h = jnp.dot(x, params['fc1_w'],
                precision=jax.lax.Precision.HIGHEST) + params['fc1_b'].reshape(-1)
    h = 0.5 * h * (1.0 + jax.lax.erf(h / math.sqrt(2.0)))
    return jnp.dot(h, params['fc2_w'],
                   precision=jax.lax.Precision.HIGHEST) + params['fc2_b'].reshape(-1)


# ----------------------------------------------------------------------------
if __name__ == "__main__":
    # Small, lane-friendly shapes: x is (batch=2, channels=4, seq=16, feat=128)
    # -> 128 flattened rows, row tile 64, grid=(2,) parallel steps.
    B, C, S = 2, 4, 16
    in_features, hidden_features, out_features = 128, 256, 128

    key = jax.random.PRNGKey(0)
    kx, k1, k2, k3, k4 = jax.random.split(key, 5)
    x = jax.random.normal(kx, (B, C, S, in_features), jnp.float32)

    # PyTorch nn.Linear-style init: U(-1/sqrt(fan_in), 1/sqrt(fan_in))
    lim1 = 1.0 / math.sqrt(in_features)
    lim2 = 1.0 / math.sqrt(hidden_features)
    params = {
        'fc1_w': jax.random.uniform(k1, (in_features, hidden_features),
                                    jnp.float32, -lim1, lim1),
        'fc1_b': jax.random.uniform(k2, (1, hidden_features),
                                    jnp.float32, -lim1, lim1),
        'fc2_w': jax.random.uniform(k3, (hidden_features, out_features),
                                    jnp.float32, -lim2, lim2),
        'fc2_b': jax.random.uniform(k4, (1, out_features),
                                    jnp.float32, -lim2, lim2),
    }

    ref = mlp_reference(x, params)

    # fp32-operand path (numerics check)
    y32 = jax.block_until_ready(mlp_pallas(x, params, matmul_dtype=jnp.float32))
    assert y32.shape == (B, C, S, out_features)
    err32 = float(jnp.max(jnp.abs(y32 - ref)))
    assert jnp.allclose(y32, ref, atol=1e-2, rtol=1e-2), err32

    # bf16-operand / fp32-accumulation path (recommended perf path on v6e/v7x)
    ybf = jax.block_until_ready(mlp_pallas(x, params, matmul_dtype=jnp.bfloat16))
    errbf = float(jnp.max(jnp.abs(ybf - ref)))
    assert jnp.allclose(ybf, ref, atol=3e-2, rtol=3e-2), errbf

    print("KERNEL_OK")
</pallas_src>

<mosaic_0001>
module attributes {stable_mosaic.version = 11 : i64} {
  func.func @mlp_kernel(%arg0: i32, %arg1: memref<64x128xf32, #tpu.memory_space<vmem>>, %arg2: memref<128x256xf32, #tpu.memory_space<vmem>>, %arg3: memref<1x256xf32, #tpu.memory_space<vmem>>, %arg4: memref<256x128xf32, #tpu.memory_space<vmem>>, %arg5: memref<1x128xf32, #tpu.memory_space<vmem>>, %arg6: memref<64x128xf32, #tpu.memory_space<vmem>>) attributes {dimension_semantics = [#tpu.dimension_semantics<parallel>], iteration_bounds = array<i64: 2>, scalar_prefetch = 0 : i64, scratch_operands = 0 : i64, tpu.core_type = #tpu.core_type<tc>, window_params = [{transform_indices = @transform_0, window_bounds = array<i64: 64, 128>}, {pipeline_mode = #tpu.pipeline_mode<synchronous>, transform_indices = @transform_1, window_bounds = array<i64: 128, 256>}, {pipeline_mode = #tpu.pipeline_mode<synchronous>, transform_indices = @transform_2, window_bounds = array<i64: 1, 256>}, {pipeline_mode = #tpu.pipeline_mode<synchronous>, transform_indices = @transform_3, window_bounds = array<i64: 256, 128>}, {pipeline_mode = #tpu.pipeline_mode<synchronous>, transform_indices = @transform_4, window_bounds = array<i64: 1, 128>}, {transform_indices = @transform_5, window_bounds = array<i64: 64, 128>}]} {
    %c0 = arith.constant 0 : index
    %c0_0 = arith.constant 0 : index
    %0 = vector.load %arg1[%c0, %c0_0] : memref<64x128xf32, #tpu.memory_space<vmem>>, vector<64x128xf32>
    %c0_1 = arith.constant 0 : index
    %c0_2 = arith.constant 0 : index
    %1 = vector.load %arg2[%c0_1, %c0_2] : memref<128x256xf32, #tpu.memory_space<vmem>>, vector<128x256xf32>
    %cst = arith.constant dense<0.000000e+00> : vector<64x256xf32>
    %2 = tpu.matmul %0, %1, %cst {dimension_numbers = #tpu.dot_dimension_numbers<[1], [0], [0], [1], [0, 0, 1, 1], [], []>} : vector<64x128xf32>, vector<128x256xf32>, vector<64x256xf32> -> vector<64x256xf32>
    %c0_3 = arith.constant 0 : index
    %c0_4 = arith.constant 0 : index
    %3 = vector.load %arg3[%c0_3, %c0_4] : memref<1x256xf32, #tpu.memory_space<vmem>>, vector<1x256xf32>
    %4 = vector.broadcast %3 : vector<1x256xf32> to vector<64x256xf32>
    %5 = arith.addf %2, %4 : vector<64x256xf32>
    %cst_5 = arith.constant 5.000000e-01 : f32
    %6 = vector.broadcast %cst_5 : f32 to vector<64x256xf32>
    %7 = arith.mulf %6, %5 : vector<64x256xf32>
    %cst_6 = arith.constant 0.707106769 : f32
    %8 = vector.broadcast %cst_6 : f32 to vector<64x256xf32>
    %9 = arith.mulf %5, %8 : vector<64x256xf32>
    %10 = math.erf %9 : vector<64x256xf32>
    %cst_7 = arith.constant 1.000000e+00 : f32
    %11 = vector.broadcast %cst_7 : f32 to vector<64x256xf32>
    %12 = arith.addf %11, %10 : vector<64x256xf32>
    %13 = arith.mulf %7, %12 : vector<64x256xf32>
    %c0_8 = arith.constant 0 : index
    %c0_9 = arith.constant 0 : index
    %14 = vector.load %arg4[%c0_8, %c0_9] : memref<256x128xf32, #tpu.memory_space<vmem>>, vector<256x128xf32>
    %cst_10 = arith.constant dense<0.000000e+00> : vector<64x128xf32>
    %15 = tpu.matmul %13, %14, %cst_10 {dimension_numbers = #tpu.dot_dimension_numbers<[1], [0], [0], [1], [0, 0, 1, 1], [], []>} : vector<64x256xf32>, vector<256x128xf32>, vector<64x128xf32> -> vector<64x128xf32>
    %c0_11 = arith.constant 0 : index
    %c0_12 = arith.constant 0 : index
    %16 = vector.load %arg5[%c0_11, %c0_12] : memref<1x128xf32, #tpu.memory_space<vmem>>, vector<1x128xf32>
    %17 = vector.broadcast %16 : vector<1x128xf32> to vector<64x128xf32>
    %18 = arith.addf %15, %17 : vector<64x128xf32>
    %c0_13 = arith.constant 0 : index
    %c0_14 = arith.constant 0 : index
    %19 = vector.load %arg6[%c0_13, %c0_14] : memref<64x128xf32, #tpu.memory_space<vmem>>, vector<64x128xf32>
    tpu.vector_store %arg6[%c0_13, %c0_14], %18 {strides = array<i32>} : memref<64x128xf32, #tpu.memory_space<vmem>>, vector<64x128xf32>,
    return
  }
  func.func @transform_0(%arg0: i32) -> (i32, i32) {
    %c0_i32 = arith.constant 0 : i32
    %c0_i32_0 = arith.constant 0 : i32
    return %arg0, %c0_i32 : i32, i32
  }
  func.func @transform_1(%arg0: i32) -> (i32, i32) {
    %c0_i32 = arith.constant 0 : i32
    %c0_i32_0 = arith.constant 0 : i32
    %c0_i32_1 = arith.constant 0 : i32
    return %c0_i32, %c0_i32_0 : i32, i32
  }
  func.func @transform_2(%arg0: i32) -> (i32, i32) {
    %c0_i32 = arith.constant 0 : i32
    %c0_i32_0 = arith.constant 0 : i32
    %c0_i32_1 = arith.constant 0 : i32
    return %c0_i32, %c0_i32_0 : i32, i32
  }
  func.func @transform_3(%arg0: i32) -> (i32, i32) {
    %c0_i32 = arith.constant 0 : i32
    %c0_i32_0 = arith.constant 0 : i32
    %c0_i32_1 = arith.constant 0 : i32
    return %c0_i32, %c0_i32_0 : i32, i32
  }
  func.func @transform_4(%arg0: i32) -> (i32, i32) {
    %c0_i32 = arith.constant 0 : i32
    %c0_i32_0 = arith.constant 0 : i32
    %c0_i32_1 = arith.constant 0 : i32
    return %c0_i32, %c0_i32_0 : i32, i32
  }
  func.func @transform_5(%arg0: i32) -> (i32, i32) {
    %c0_i32 = arith.constant 0 : i32
    %c0_i32_0 = arith.constant 0 : i32
    return %arg0, %c0_i32 : i32, i32
  }
}

</mosaic_0001>

<llo_original>
// kernel: tpu_custom_call.1
$region0: #{tpu_custom_call.1}
  #allocation0 [shape = 'u32[]', space=smem, size = 0x4, offset = 0x4, fixed_abs, tag = 'smem constant byte address 0x4 - core index']
  #allocation1 [shape = 'u32[72,128]{1,0:T(1,128)}', space=vmem, size = 0x9000, scoped, tag = 'internal scratch']
  %s0 = inlined_call_operand.hbm [shape: f32[128,128], index: 0, kind: input, shape index: {}]
  %s1 = inlined_call_operand.hbm [shape: f32[128,256], index: 1, kind: input, shape index: {}]
  %s2 = inlined_call_operand.hbm [shape: f32[1,256], index: 2, kind: input, shape index: {}]
  %s3 = inlined_call_operand.hbm [shape: f32[256,128], index: 3, kind: input, shape index: {}]
  %s4 = inlined_call_operand.vmem [shape: f32[1,128], index: 4, kind: input, shape index: {}]
  %s5 = inlined_call_operand.hbm [shape: f32[128,128], index: 5, kind: output, shape index: {}]
  %s6 = sld [smem:[#allocation0]]
  $region69: #{tpu_custom_call.1} parent=0
    _
  %s8 = ssub.s32 1, %s6
  %s9 = scalar_select 0, %s8, %s6
  $region1: #{tpu_custom_call.1} parent=0
    #allocation2 [shape = 'u8[65536]{0}', space=vmem, size = 0x10000, scoped, tag = 'input window, operand 0']
    #allocation3 [shape = 's32[2]{0}', space=sflag, size = 0x8, scoped, tag = 'scoped memory for tpu_custom_call.1']
    #allocation4 [shape = 's32[2]{0}', space=sflag, size = 0x8, scoped, tag = 'scoped memory for tpu_custom_call.1']
    #allocation5 [shape = 'u8[131072]{0}', space=vmem, size = 0x20000, scoped, tag = 'input window, operand 1, single buffered']
    #allocation6 [shape = 's32[1]{0}', space=sflag, size = 0x4, scoped, tag = 'scoped memory for tpu_custom_call.1']
    #allocation7 [shape = 'u8[1024]{0}', space=vmem, size = 0x400, scoped, tag = 'input window, operand 2, single buffered']
    #allocation8 [shape = 'u8[131072]{0}', space=vmem, size = 0x20000, scoped, tag = 'input window, operand 3, single buffered']
    #allocation9 [shape = 's32[1]{0}', space=sflag, size = 0x4, scoped, tag = 'scoped memory for tpu_custom_call.1']
    #allocation10 [shape = 'u8[65536]{0}', space=vmem, size = 0x10000, scoped, tag = 'output window, operand 0']
    %10 = vsyncpa [#allocation3], 0
    %s11 = scalar_lea.sflag [#allocation3], 1
    %12 = vsyncpa %s11, 0
    %13 = vsyncpa [#allocation6], 0
    %14 = vsyncpa [#allocation9], 0
    %15 = vsyncpa [#allocation4], 0
    %s16 = scalar_lea.sflag [#allocation4], 1
    %17 = vsyncpa %s16, 0
    loop: start=0, step=1, limit=4
    $region2: #{tpu_custom_call.1} parent=1 // loop_pre_header
      _
    $region3: #{tpu_custom_call.1} parent=1 // loop_header
      %s19 = sphi 0, %s23
      %p20 = scmp.ge.s32.totalorder %s19, 4
      %s29 = sphi 0, %s31
      %s32 = sphi 0, %s29
      %s33 = sphi 0, %s32
      %s49 = sphi 0, %s33
      %s53 = sphi 0, %s53
      %s55 = sphi 0, %s53
      %s56 = sphi 0, %s55
      %s70 = sphi 0, %s56
      %s74 = sphi 0, %s74
      %s76 = sphi 0, %s74
      %s77 = sphi 0, %s76
      %s91 = sphi 0, %s77
      %s95 = sphi 0, %s95
      %s97 = sphi 0, %s95
      %s98 = sphi 0, %s97
      %s112 = sphi 0, %s98
      %s116 = sphi 0, %s116
      %s118 = sphi 0, %s116
      %s119 = sphi 0, %s118
      %s133 = sphi 0, %s119
      %s139 = sphi 0, %s141
      %s142 = sphi 0, %s139
      %s143 = sphi 0, %s142
      %s159 = sphi 0, %s143
    $region4: #{tpu_custom_call.1} parent=1 // loop_header_branch
      %22 = sbr.rel (%p20) target = $region8
    $region5: #{tpu_custom_call.1} parent=1 // loop_body
      %s24 = ssub.s32 %s19, 1
      %s25 = ssub.s32 %s19, 2
      %s26 = sadd.s32 %s19, 1
      %s27 = ssub.s32 %s19, %s26
      %p28 = scmp.eq.s32.totalorder %s27, 0
      %s30 = sadd.s32 %s29, 1
      %s31 = scalar_select %p28, %s29, %s30
      %p34 = pneg %p28
      %p35 = scmp.eq.s32.totalorder %s19, 1
      %p36 = por %p34, %p35
      %p37 = scmp.ne.s32.totalorder %s29, %s32
      %p38 = scmp.eq.s32.totalorder %s19, 0
      %p39 = por %p37, %p38
      %p40 = scmp.ne.s32.totalorder %s29, %s32
      %p41 = scmp.eq.s32.totalorder %s24, 1
      %p42 = por %p40, %p41
      %p43 = scmp.ne.s32.totalorder %s32, %s33
      %p44 = scmp.eq.s32.totalorder %s24, 0
      %p45 = por %p43, %p44
      %p46 = scmp.ne.s32.totalorder %s32, %s33
      %p47 = scmp.eq.s32.totalorder %s25, 1
      %p48 = por %p46, %p47
      %p50 = scmp.ne.s32.totalorder %s33, %s49
      %p51 = scmp.eq.s32.totalorder %s25, 0
      %p52 = por %p50, %p51
      %s54 = sadd.s32 %s53, 1
      %p57 = scmp.eq.s32.totalorder %s19, 1
      %p58 = scmp.ne.s32.totalorder %s53, %s55
      %p59 = scmp.eq.s32.totalorder %s19, 0
      %p60 = por %p58, %p59
      %p61 = scmp.ne.s32.totalorder %s53, %s55
      %p62 = scmp.eq.s32.totalorder %s24, 1
      %p63 = por %p61, %p62
      %p64 = scmp.ne.s32.totalorder %s55, %s56
      %p65 = scmp.eq.s32.totalorder %s24, 0
      %p66 = por %p64, %p65
      %p67 = scmp.ne.s32.totalorder %s55, %s56
      %p68 = scmp.eq.s32.totalorder %s25, 1
      %p69 = por %p67, %p68
      %p71 = scmp.ne.s32.totalorder %s56, %s70
      %p72 = scmp.eq.s32.totalorder %s25, 0
      %p73 = por %p71, %p72
      %s75 = sadd.s32 %s74, 1
      %p78 = scmp.eq.s32.totalorder %s19, 1
      %p79 = scmp.ne.s32.totalorder %s74, %s76
      %p80 = scmp.eq.s32.totalorder %s19, 0
      %p81 = por %p79, %p80
      %p82 = scmp.ne.s32.totalorder %s74, %s76
      %p83 = scmp.eq.s32.totalorder %s24, 1
      %p84 = por %p82, %p83
      %p85 = scmp.ne.s32.totalorder %s76, %s77
      %p86 = scmp.eq.s32.totalorder %s24, 0
      %p87 = por %p85, %p86
      %p88 = scmp.ne.s32.totalorder %s76, %s77
      %p89 = scmp.eq.s32.totalorder %s25, 1
      %p90 = por %p88, %p89
      %p92 = scmp.ne.s32.totalorder %s77, %s91
      %p93 = scmp.eq.s32.totalorder %s25, 0
      %p94 = por %p92, %p93
      %s96 = sadd.s32 %s95, 1
      %p99 = scmp.eq.s32.totalorder %s19, 1
      %p100 = scmp.ne.s32.totalorder %s95, %s97
      %p101 = scmp.eq.s32.totalorder %s19, 0
      %p102 = por %p100, %p101
      %p103 = scmp.ne.s32.totalorder %s95, %s97
      %p104 = scmp.eq.s32.totalorder %s24, 1
      %p105 = por %p103, %p104
      %p106 = scmp.ne.s32.totalorder %s97, %s98
      %p107 = scmp.eq.s32.totalorder %s24, 0
      %p108 = por %p106, %p107
      %p109 = scmp.ne.s32.totalorder %s97, %s98
      %p110 = scmp.eq.s32.totalorder %s25, 1
      %p111 = por %p109, %p110
      %p113 = scmp.ne.s32.totalorder %s98, %s112
      %p114 = scmp.eq.s32.totalorder %s25, 0
      %p115 = por %p113, %p114
      %s117 = sadd.s32 %s116, 1
      %p120 = scmp.eq.s32.totalorder %s19, 1
      %p121 = scmp.ne.s32.totalorder %s116, %s118
      %p122 = scmp.eq.s32.totalorder %s19, 0
      %p123 = por %p121, %p122
      %p124 = scmp.ne.s32.totalorder %s116, %s118
      %p125 = scmp.eq.s32.totalorder %s24, 1
      %p126 = por %p124, %p125
      %p127 = scmp.ne.s32.totalorder %s118, %s119
      %p128 = scmp.eq.s32.totalorder %s24, 0
      %p129 = por %p127, %p128
      %p130 = scmp.ne.s32.totalorder %s118, %s119
      %p131 = scmp.eq.s32.totalorder %s25, 1
      %p132 = por %p130, %p131
      %p134 = scmp.ne.s32.totalorder %s119, %s133
      %p135 = scmp.eq.s32.totalorder %s25, 0
      %p136 = por %p134, %p135
      %s137 = ssub.s32 %s19, %s26
      %p138 = scmp.eq.s32.totalorder %s137, 0
      %s140 = sadd.s32 %s139, 1
      %s141 = scalar_select %p138, %s139, %s140
      %p144 = pneg %p138
      %p145 = scmp.eq.s32.totalorder %s19, 1
      %p146 = por %p144, %p145
      %p147 = scmp.ne.s32.totalorder %s139, %s142
      %p148 = scmp.eq.s32.totalorder %s19, 0
      %p149 = por %p147, %p148
      %p150 = scmp.ne.s32.totalorder %s139, %s142
      %p151 = scmp.eq.s32.totalorder %s24, 1
      %p152 = por %p150, %p151
      %p153 = scmp.ne.s32.totalorder %s142, %s143
      %p154 = scmp.eq.s32.totalorder %s24, 0
      %p155 = por %p153, %p154
      %p156 = scmp.ne.s32.totalorder %s142, %s143
      %p157 = scmp.eq.s32.totalorder %s25, 1
      %p158 = por %p156, %p157
      %p160 = scmp.ne.s32.totalorder %s143, %s159
      %p161 = scmp.eq.s32.totalorder %s25, 0
      %p162 = por %p160, %p161
      %p163 = scmp.le.s32.totalorder 1, %s19
      %p164 = scmp.lt.s32.totalorder %s19, 3
      %p165 = pnand %p163, %p164
      %p166 = pneg %p165
      // Predicated region
      $region9: #{tpu_custom_call.1} parent=5 // pred_check
        _
      $region10: #{tpu_custom_call.1} parent=5 // pred_check_branch
        %168 = sbr.rel (%p165) target = $region12
      $region11: #{tpu_custom_call.1} parent=5 // pred_region
        %s169 = ssub.s32 %s19, 1
        // Predicated region
        $region13: #{tpu_custom_call.1} parent=11 // pred_check
          %p170 = pneg %p66
        $region14: #{tpu_custom_call.1} parent=11 // pred_check_branch
          %172 = sbr.rel (%p170) target = $region16
        $region15: #{tpu_custom_call.1} parent=11 // pred_region
          %174 = vsyncadd [#allocation6], 0
          %s175 = sshll.u32 %s1, 4
          %s176 = int_to_ptr.hbm [resolvable:$true] %s175
          %s177 = sshll.u32 [#allocation5], 4
          %s178 = int_to_ptr.vmem [resolvable:$true] %s177
          %183 = dma.hbm_to_vmem [thread:$0]  %s176, 4096, %s178, [#allocation6], 256, 256, 16
        $region16: #{tpu_custom_call.1} parent=11 // pred_fallthru
          _
        // Predicated region
        $region17: #{tpu_custom_call.1} parent=11 // pred_check
          %p184 = pneg %p87
        $region18: #{tpu_custom_call.1} parent=11 // pred_check_branch
          %186 = sbr.rel (%p184) target = $region20
        $region19: #{tpu_custom_call.1} parent=11 // pred_region
          %188 = vsyncadd [#allocation6], 0
          %s190 = sshll.u32 %s2, 4
          %s191 = int_to_ptr.hbm [resolvable:$true] %s190
          %s192 = sshll.u32 [#allocation7], 4
          %s193 = int_to_ptr.vmem [resolvable:$true] %s192
          %195 = dma.hbm_to_vmem [thread:$0]  %s191, 32, %s193, [#allocation6]
        $region20: #{tpu_custom_call.1} parent=11 // pred_fallthru
          _
        // Predicated region
        $region21: #{tpu_custom_call.1} parent=11 // pred_check
          %p196 = pneg %p108
        $region22: #{tpu_custom_call.1} parent=11 // pred_check_branch
          %198 = sbr.rel (%p196) target = $region24
        $region23: #{tpu_custom_call.1} parent=11 // pred_region
          %200 = vsyncadd [#allocation9], 0
          %s201 = sshll.u32 %s3, 4
          %s202 = int_to_ptr.hbm [resolvable:$true] %s201
          %s203 = sshll.u32 [#allocation8], 4
          %s204 = int_to_ptr.vmem [resolvable:$true] %s203
          %209 = dma.hbm_to_vmem [thread:$0]  %s202, 4096, %s204, [#allocation9], 128, 128, 8
        $region24: #{tpu_custom_call.1} parent=11 // pred_fallthru
          _
        // Predicated region
        $region25: #{tpu_custom_call.1} parent=11 // pred_check
          %p210 = pneg %p129
        $region26: #{tpu_custom_call.1} parent=11 // pred_check_branch
          %212 = sbr.rel (%p210) target = $region28
        $region27: #{tpu_custom_call.1} parent=11 // pred_region
          _
        $region28: #{tpu_custom_call.1} parent=11 // pred_fallthru
          _
      $region12: #{tpu_custom_call.1} parent=5 // pred_fallthru
        _
      %p213 = scmp.lt.s32.totalorder %s19, 2
      // Predicated region
      $region29: #{tpu_custom_call.1} parent=5 // pred_check
        %p214 = pneg %p213
      $region30: #{tpu_custom_call.1} parent=5 // pred_check_branch
        %216 = sbr.rel (%p214) target = $region32
      $region31: #{tpu_custom_call.1} parent=5 // pred_region
        // Predicated region
        $region33: #{tpu_custom_call.1} parent=31 // pred_check
          %p217 = pneg %p39
        $region34: #{tpu_custom_call.1} parent=31 // pred_check_branch
          %219 = sbr.rel (%p217) target = $region36
        $region35: #{tpu_custom_call.1} parent=31 // pred_region
          %s220 = sand.u32 %s29, 1
          %s221 = scalar_lea.sflag [#allocation3], %s220
          %s222 = sand.u32 %s29, 1
          %s223 = smul.addr %s222, 64
          %s224 = scalar_lea.vmem [#allocation2], %s223
          %s225 = smul.u32 8, %s19
          %227 = vsyncadd %s221, 0
          %s228 = smul.addr %s225, 8
          %s229 = scalar_lea.hbm %s0, %s228
          %s230 = sshll.u32 %s229, 4
          %s231 = int_to_ptr.hbm [resolvable:$true] %s230
          %s232 = sshll.u32 %s224, 4
          %s233 = int_to_ptr.vmem [resolvable:$true] %s232
          %238 = dma.hbm_to_vmem [thread:$0]  %s231, 1024, %s233, %s221, 128, 128, 8
        $region36: #{tpu_custom_call.1} parent=31 // pred_fallthru
          _
      $region32: #{tpu_custom_call.1} parent=5 // pred_fallthru
        _
      %p239 = scmp.le.s32.totalorder 1, %s19
      %p240 = scmp.lt.s32.totalorder %s19, 3
      %p241 = pnand %p239, %p240
      %p242 = pneg %p241
      // Predicated region
      $region37: #{tpu_custom_call.1} parent=5 // pred_check
        _
      $region38: #{tpu_custom_call.1} parent=5 // pred_check_branch
        %244 = sbr.rel (%p241) target = $region40
      $region39: #{tpu_custom_call.1} parent=5 // pred_region
        %s245 = ssub.s32 %s19, 1
        %s246 = sand.u32 %s32, 1
        %s247 = scalar_lea.sflag [#allocation3], %s246
        %s248 = sand.u32 %s32, 1
        %s249 = smul.addr %s248, 64
        %s250 = scalar_lea.vmem [#allocation2], %s249
        // Predicated region
        $region41: #{tpu_custom_call.1} parent=39 // pred_check
          %p251 = pneg %p45
        $region42: #{tpu_custom_call.1} parent=39 // pred_check_branch
          %253 = sbr.rel (%p251) target = $region44
        $region43: #{tpu_custom_call.1} parent=39 // pred_region
          %255 = dma.done %s247, 1024
        $region44: #{tpu_custom_call.1} parent=39 // pred_fallthru
          _
        // Predicated region
        $region45: #{tpu_custom_call.1} parent=39 // pred_check
          %p256 = pneg %p66
        $region46: #{tpu_custom_call.1} parent=39 // pred_check_branch
          %258 = sbr.rel (%p256) target = $region48
        $region47: #{tpu_custom_call.1} parent=39 // pred_region
          %260 = dma.done [#allocation6], 4096
        $region48: #{tpu_custom_call.1} parent=39 // pred_fallthru
          _
        // Predicated region
        $region49: #{tpu_custom_call.1} parent=39 // pred_check
          %p261 = pneg %p87
        $region50: #{tpu_custom_call.1} parent=39 // pred_check_branch
          %263 = sbr.rel (%p261) target = $region52
        $region51: #{tpu_custom_call.1} parent=39 // pred_region
          %265 = dma.done [#allocation6], 32
        $region52: #{tpu_custom_call.1} parent=39 // pred_fallthru
          _
        // Predicated region
        $region53: #{tpu_custom_call.1} parent=39 // pred_check
          %p266 = pneg %p108
        $region54: #{tpu_custom_call.1} parent=39 // pred_check_branch
          %268 = sbr.rel (%p266) target = $region56
        $region55: #{tpu_custom_call.1} parent=39 // pred_region
          %270 = dma.done [#allocation9], 4096
        $region56: #{tpu_custom_call.1} parent=39 // pred_fallthru
          _
        %s271 = sand.u32 %s32, 1
        %s272 = scalar_lea.sflag [#allocation3], %s271
        %s273 = sand.u32 %s32, 1
        %s274 = smul.addr %s273, 64
        %s275 = scalar_lea.vmem [#allocation2], %s274
        %p276 = pneg %p45
        %p277 = pneg %p42
        %p278 = pneg %p66
        %p279 = pneg %p63
        %p280 = pneg %p87
        %p281 = pneg %p84
        %p282 = pneg %p108
        %p283 = pneg %p105
        %p284 = pneg %p129
        %p285 = pneg %p126
        %p286 = pneg %p155
        %p287 = pneg %p152
        %s288 = sand.u32 %s142, 1
        %s289 = scalar_lea.sflag [#allocation4], %s288
        %s290 = sand.u32 %s142, 1
        %s291 = smul.addr %s290, 64
        %s292 = scalar_lea.vmem [#allocation10], %s291
        %s293 = smul.u32 8, %s24
        %s294 = smul.u32 8, %s24
        %v295 = vld [vmem:[%s250] sm:$0xff]
        %v296 = vld [vmem:[%s250 + $0x8] sm:$0xff]
        %v297 = vld [vmem:[%s250 + $0x10] sm:$0xff]
        %v298 = vld [vmem:[%s250 + $0x18] sm:$0xff]
        %v299 = vld [vmem:[%s250 + $0x20] sm:$0xff]
        %v300 = vld [vmem:[%s250 + $0x28] sm:$0xff]
        %v301 = vld [vmem:[%s250 + $0x30] sm:$0xff]
        %v302 = vld [vmem:[%s250 + $0x38] sm:$0xff]
        %v303 = vld [vmem:[#allocation5] sm:$0xff]
        %v304 = vld [vmem:[#allocation5 + $0x8] sm:$0xff]
        %v305 = vld [vmem:[#allocation5 + $0x10] sm:$0xff]
        %v306 = vld [vmem:[#allocation5 + $0x18] sm:$0xff]
        %v307 = vld [vmem:[#allocation5 + $0x20] sm:$0xff]
        %v308 = vld [vmem:[#allocation5 + $0x28] sm:$0xff]
        %v309 = vld [vmem:[#allocation5 + $0x30] sm:$0xff]
        %v310 = vld [vmem:[#allocation5 + $0x38] sm:$0xff]
        %v311 = vld [vmem:[#allocation5 + $0x40] sm:$0xff]
        %v312 = vld [vmem:[#allocation5 + $0x48] sm:$0xff]
        %v313 = vld [vmem:[#allocation5 + $0x50] sm:$0xff]
        %v314 = vld [vmem:[#allocation5 + $0x58] sm:$0xff]
        %v315 = vld [vmem:[#allocation5 + $0x60] sm:$0xff]
        %v316 = vld [vmem:[#allocation5 + $0x68] sm:$0xff]
        %v317 = vld [vmem:[#allocation5 + $0x70] sm:$0xff]
        %v318 = vld [vmem:[#allocation5 + $0x78] sm:$0xff]
        %v319 = vld [vmem:[#allocation5 + $0x80] sm:$0xff]
        %v320 = vld [vmem:[#allocation5 + $0x88] sm:$0xff]
        %v321 = vld [vmem:[#allocation5 + $0x90] sm:$0xff]
        %v322 = vld [vmem:[#allocation5 + $0x98] sm:$0xff]
        %v323 = vld [vmem:[#allocation5 + $0xa0] sm:$0xff]
        %v324 = vld [vmem:[#allocation5 + $0xa8] sm:$0xff]
        %v325 = vld [vmem:[#allocation5 + $0xb0] sm:$0xff]
        %v326 = vld [vmem:[#allocation5 + $0xb8] sm:$0xff]
        %v327 = vld [vmem:[#allocation5 + $0xc0] sm:$0xff]
        %v328 = vld [vmem:[#allocation5 + $0xc8] sm:$0xff]
        %v329 = vld [vmem:[#allocation5 + $0xd0] sm:$0xff]
        %v330 = vld [vmem:[#allocation5 + $0xd8] sm:$0xff]
        %v331 = vld [vmem:[#allocation5 + $0xe0] sm:$0xff]
        %v332 = vld [vmem:[#allocation5 + $0xe8] sm:$0xff]
        %v333 = vld [vmem:[#allocation5 + $0xf0] sm:$0xff]
        %v334 = vld [vmem:[#allocation5 + $0xf8] sm:$0xff]
        %v335 = vld [vmem:[#allocation7] sm:$0x3]
        %v337 = vperm.slane %v335, 0
        %v338 = vperm.slane %v335, 1
        %341 = vmatpush.msra.mxu0 %v333
        %342 = vmatpush.msra.mxu0 %v331
        %343 = vmatpush.msra.mxu0 %v329
        %344 = vmatpush.msra.mxu0 %v327
        %345 = vmatpush.msra.mxu0 %v325
        %346 = vmatpush.msra.mxu0 %v323
        %347 = vmatpush.msra.mxu0 %v321
        %348 = vmatpush.msra.mxu0 %v319
        %349 = vmatpush.msra.mxu0 %v317
        %350 = vmatpush.msra.mxu0 %v315
        %351 = vmatpush.msra.mxu0 %v313
        %352 = vmatpush.msra.mxu0 %v311
        %353 = vmatpush.msra.mxu0 %v309
        %354 = vmatpush.msra.mxu0 %v307
        %355 = vmatpush.msra.mxu0 %v305
        %356 = vmatpush.msra.mxu0 %v303
        %357 = vmatmul.f32.gmra.mxu0 %v295
        %v358 = vpop.f32.mrf.mxu0
        %v359 = vadd.f32 %v337, %v358
        %360 = vmatmul.f32.gmra.mxu0 %v296
        %v361 = vpop.f32.mrf.mxu0
        %v362 = vadd.f32 %v337, %v361
        %363 = vmatmul.f32.gmra.mxu0 %v297
        %v364 = vpop.f32.mrf.mxu0
        %v365 = vadd.f32 %v337, %v364
        %366 = vmatmul.f32.gmra.mxu0 %v298
        %v367 = vpop.f32.mrf.mxu0
        %v368 = vadd.f32 %v337, %v367
        %369 = vmatmul.f32.gmra.mxu0 %v299
        %v370 = vpop.f32.mrf.mxu0
        %v371 = vadd.f32 %v337, %v370
        %372 = vmatmul.f32.gmra.mxu0 %v300
        %v373 = vpop.f32.mrf.mxu0
        %v374 = vadd.f32 %v337, %v373
        %375 = vmatmul.f32.gmra.mxu0 %v301
        %v376 = vpop.f32.mrf.mxu0
        %v377 = vadd.f32 %v337, %v376
        %378 = vmatmul.f32.gmra.mxu0 %v302
        %v379 = vpop.f32.mrf.mxu0
        %v380 = vadd.f32 %v337, %v379
        %381 = vdwg.mxu0
        %382 = vmatpush.msra.mxu0 %v334
        %383 = vmatpush.msra.mxu0 %v332
        %384 = vmatpush.msra.mxu0 %v330
        %385 = vmatpush.msra.mxu0 %v328
        %386 = vmatpush.msra.mxu0 %v326
        %387 = vmatpush.msra.mxu0 %v324
        %388 = vmatpush.msra.mxu0 %v322
        %389 = vmatpush.msra.mxu0 %v320
        %390 = vmatpush.msra.mxu0 %v318
        %391 = vmatpush.msra.mxu0 %v316
        %392 = vmatpush.msra.mxu0 %v314
        %393 = vmatpush.msra.mxu0 %v312
        %394 = vmatpush.msra.mxu0 %v310
        %395 = vmatpush.msra.mxu0 %v308
        %396 = vmatpush.msra.mxu0 %v306
        %397 = vmatpush.msra.mxu0 %v304
        %398 = vmatmul.f32.gmra.mxu0 %v295
        %v399 = vpop.f32.mrf.mxu0
        %v400 = vadd.f32 %v338, %v399
        %401 = vmatmul.f32.gmra.mxu0 %v296
        %v402 = vpop.f32.mrf.mxu0
        %v403 = vadd.f32 %v338, %v402
        %404 = vmatmul.f32.gmra.mxu0 %v297
        %v405 = vpop.f32.mrf.mxu0
        %v406 = vadd.f32 %v338, %v405
        %407 = vmatmul.f32.gmra.mxu0 %v298
        %v408 = vpop.f32.mrf.mxu0
        %v409 = vadd.f32 %v338, %v408
        %410 = vmatmul.f32.gmra.mxu0 %v299
        %v411 = vpop.f32.mrf.mxu0
        %v412 = vadd.f32 %v338, %v411
        %413 = vmatmul.f32.gmra.mxu0 %v300
        %v414 = vpop.f32.mrf.mxu0
        %v415 = vadd.f32 %v338, %v414
        %416 = vmatmul.f32.gmra.mxu0 %v301
        %v417 = vpop.f32.mrf.mxu0
        %v418 = vadd.f32 %v338, %v417
        %419 = vmatmul.f32.gmra.mxu0 %v302
        %v420 = vpop.f32.mrf.mxu0
        %v421 = vadd.f32 %v338, %v420
        %422 = vdwg.mxu0
        %v423 = vmul.f32 %v359, 0.5
        %v424 = vmul.f32 %v400, 0.5
        %v425 = vmul.f32 %v362, 0.5
        %v426 = vmul.f32 %v403, 0.5
        %v427 = vmul.f32 %v365, 0.5
        %v428 = vmul.f32 %v406, 0.5
        %v429 = vmul.f32 %v368, 0.5
        %v430 = vmul.f32 %v409, 0.5
        %v431 = vmul.f32 %v371, 0.5
        %v432 = vmul.f32 %v412, 0.5
        %v433 = vmul.f32 %v374, 0.5
        %v434 = vmul.f32 %v415, 0.5
        %v435 = vmul.f32 %v377, 0.5
        %v436 = vmul.f32 %v418, 0.5
        %v437 = vmul.f32 %v380, 0.5
        %v438 = vmul.f32 %v421, 0.5
        %v439 = vmul.f32 %v359, 0.70710677
        %v440 = vmul.f32 %v400, 0.70710677
        %v441 = vmul.f32 %v362, 0.70710677
        %v442 = vmul.f32 %v403, 0.70710677
        %v443 = vmul.f32 %v365, 0.70710677
        %v444 = vmul.f32 %v406, 0.70710677
        %v445 = vmul.f32 %v368, 0.70710677
        %v446 = vmul.f32 %v409, 0.70710677
        %v447 = vmul.f32 %v371, 0.70710677
        %v448 = vmul.f32 %v412, 0.70710677
        %v449 = vmul.f32 %v374, 0.70710677
        %v450 = vmul.f32 %v415, 0.70710677
        %v451 = vmul.f32 %v377, 0.70710677
        %v452 = vmul.f32 %v418, 0.70710677
        %v453 = vmul.f32 %v380, 0.70710677
        %v454 = vmul.f32 %v421, 0.70710677
        %v455 = vmul.f32 %v439, %v439
        %v456 = vmin.f32 16.0, %v455
        %v457 = vmul.f32 %v456, 2.1237322e-06
        %v458 = vadd.f32 %v457, 0.00028619796
        %v459 = vmul.f32 %v456, %v458
        %v460 = vadd.f32 %v459, 0.0036580483
        %v461 = vmul.f32 %v456, %v460
        %v462 = vadd.f32 %v461, 0.05243302
        %v463 = vmul.f32 %v456, %v462
        %v464 = vadd.f32 %v463, 0.18741608
        %v465 = vmul.f32 %v456, %v464
        %v466 = vadd.f32 %v465, 1.1283791
        %v467 = vmul.f32 %v439, %v466
        %v468 = vmul.f32 %v456, 3.8918573e-05
        %v469 = vadd.f32 %v468, 0.001143296
        %v470 = vmul.f32 %v456, %v469
        %v471 = vadd.f32 %v470, 0.014752088
        %v472 = vmul.f32 %v456, %v471
        %v473 = vadd.f32 %v472, 0.112945676
        %v474 = vmul.f32 %v456, %v473
        %v475 = vadd.f32 %v474, 0.4994258
        %v476 = vmul.f32 %v456, %v475
        %v477 = vadd.f32 %v476, 1.0
        %v478 = vrcp.pop %v477
        %v479 = vmul.f32 %v477, %v478
        %v480 = vsub.f32 1.0, %v479
        %v481 = vmul.f32 %v478, %v480
        %v482 = vadd.f32 %v478, %v481
        %vm483 = vweird.f32 %v477
        %vm484 = vweird.f32 %v478
        %vm485 = vmor %vm483, %vm484
        %v486 = vsel %vm485, %v478, %v482
        %v487 = vand.u32 2147483647, %v477
        %vm488 = vcmp.eq.f32.partialorder %v487, 8.507059e+37
        %v489 = vand.u32 %v477, 2147483648
        %v490 = vor.u32 1.1754944e-38, %v489
        %v491 = vsel %vm488, %v490, %v486
        %v492 = vmul.f32 %v467, %v491
        %v493 = vmin.f32 %v492, 1.0
        %v494 = vmax.f32 %v493, -1.0
        %v495 = vmul.f32 %v440, %v440
        %v496 = vmin.f32 16.0, %v495
        %v497 = vmul.f32 %v496, 2.1237322e-06
        %v498 = vadd.f32 %v497, 0.00028619796
        %v499 = vmul.f32 %v496, %v498
        %v500 = vadd.f32 %v499, 0.0036580483
        %v501 = vmul.f32 %v496, %v500
        %v502 = vadd.f32 %v501, 0.05243302
        %v503 = vmul.f32 %v496, %v502
        %v504 = vadd.f32 %v503, 0.18741608
        %v505 = vmul.f32 %v496, %v504
        %v506 = vadd.f32 %v505, 1.1283791
        %v507 = vmul.f32 %v440, %v506
        %v508 = vmul.f32 %v496, 3.8918573e-05
        %v509 = vadd.f32 %v508, 0.001143296
        %v510 = vmul.f32 %v496, %v509
        %v511 = vadd.f32 %v510, 0.014752088
        %v512 = vmul.f32 %v496, %v511
        %v513 = vadd.f32 %v512, 0.112945676
        %v514 = vmul.f32 %v496, %v513
        %v515 = vadd.f32 %v514, 0.4994258
        %v516 = vmul.f32 %v496, %v515
        %v517 = vadd.f32 %v516, 1.0
        %v518 = vrcp.pop %v517
        %v519 = vmul.f32 %v517, %v518
        %v520 = vsub.f32 1.0, %v519
        %v521 = vmul.f32 %v518, %v520
        %v522 = vadd.f32 %v518, %v521
        %vm523 = vweird.f32 %v517
        %vm524 = vweird.f32 %v518
        %vm525 = vmor %vm523, %vm524
        %v526 = vsel %vm525, %v518, %v522
        %v527 = vand.u32 2147483647, %v517
        %vm528 = vcmp.eq.f32.partialorder %v527, 8.507059e+37
        %v529 = vand.u32 %v517, 2147483648
        %v530 = vor.u32 1.1754944e-38, %v529
        %v531 = vsel %vm528, %v530, %v526
        %v532 = vmul.f32 %v507, %v531
        %v533 = vmin.f32 %v532, 1.0
        %v534 = vmax.f32 %v533, -1.0
        %v535 = vmul.f32 %v441, %v441
        %v536 = vmin.f32 16.0, %v535
        %v537 = vmul.f32 %v536, 2.1237322e-06
        %v538 = vadd.f32 %v537, 0.00028619796
        %v539 = vmul.f32 %v536, %v538
        %v540 = vadd.f32 %v539, 0.0036580483
        %v541 = vmul.f32 %v536, %v540
        %v542 = vadd.f32 %v541, 0.05243302
        %v543 = vmul.f32 %v536, %v542
        %v544 = vadd.f32 %v543, 0.18741608
        %v545 = vmul.f32 %v536, %v544
        %v546 = vadd.f32 %v545, 1.1283791
        %v547 = vmul.f32 %v441, %v546
        %v548 = vmul.f32 %v536, 3.8918573e-05
        %v549 = vadd.f32 %v548, 0.001143296
        %v550 = vmul.f32 %v536, %v549
        %v551 = vadd.f32 %v550, 0.014752088
        %v552 = vmul.f32 %v536, %v551
        %v553 = vadd.f32 %v552, 0.112945676
        %v554 = vmul.f32 %v536, %v553
        %v555 = vadd.f32 %v554, 0.4994258
        %v556 = vmul.f32 %v536, %v555
        %v557 = vadd.f32 %v556, 1.0
        %v558 = vrcp.pop %v557
        %v559 = vmul.f32 %v557, %v558
        %v560 = vsub.f32 1.0, %v559
        %v561 = vmul.f32 %v558, %v560
        %v562 = vadd.f32 %v558, %v561
        %vm563 = vweird.f32 %v557
        %vm564 = vweird.f32 %v558
        %vm565 = vmor %vm563, %vm564
        %v566 = vsel %vm565, %v558, %v562
        %v567 = vand.u32 2147483647, %v557
        %vm568 = vcmp.eq.f32.partialorder %v567, 8.507059e+37
        %v569 = vand.u32 %v557, 2147483648
        %v570 = vor.u32 1.1754944e-38, %v569
        %v571 = vsel %vm568, %v570, %v566
        %v572 = vmul.f32 %v547, %v571
        %v573 = vmin.f32 %v572, 1.0
        %v574 = vmax.f32 %v573, -1.0
        %v575 = vmul.f32 %v442, %v442
        %v576 = vmin.f32 16.0, %v575
        %v577 = vmul.f32 %v576, 2.1237322e-06
        %v578 = vadd.f32 %v577, 0.00028619796
        %v579 = vmul.f32 %v576, %v578
        %v580 = vadd.f32 %v579, 0.0036580483
        %v581 = vmul.f32 %v576, %v580
        %v582 = vadd.f32 %v581, 0.05243302
        %v583 = vmul.f32 %v576, %v582
        %v584 = vadd.f32 %v583, 0.18741608
        %v585 = vmul.f32 %v576, %v584
        %v586 = vadd.f32 %v585, 1.1283791
        %v587 = vmul.f32 %v442, %v586
        %v588 = vmul.f32 %v576, 3.8918573e-05
        %v589 = vadd.f32 %v588, 0.001143296
        %v590 = vmul.f32 %v576, %v589
        %v591 = vadd.f32 %v590, 0.014752088
        %v592 = vmul.f32 %v576, %v591
        %v593 = vadd.f32 %v592, 0.112945676
        %v594 = vmul.f32 %v576, %v593
        %v595 = vadd.f32 %v594, 0.4994258
        %v596 = vmul.f32 %v576, %v595
        %v597 = vadd.f32 %v596, 1.0
        %v598 = vrcp.pop %v597
        %v599 = vmul.f32 %v597, %v598
        %v600 = vsub.f32 1.0, %v599
        %v601 = vmul.f32 %v598, %v600
        %v602 = vadd.f32 %v598, %v601
        %vm603 = vweird.f32 %v597
        %vm604 = vweird.f32 %v598
        %vm605 = vmor %vm603, %vm604
        %v606 = vsel %vm605, %v598, %v602
        %v607 = vand.u32 2147483647, %v597
        %vm608 = vcmp.eq.f32.partialorder %v607, 8.507059e+37
        %v609 = vand.u32 %v597, 2147483648
        %v610 = vor.u32 1.1754944e-38, %v609
        %v611 = vsel %vm608, %v610, %v606
        %v612 = vmul.f32 %v587, %v611
        %v613 = vmin.f32 %v612, 1.0
        %v614 = vmax.f32 %v613, -1.0
        %v615 = vmul.f32 %v443, %v443
        %v616 = vmin.f32 16.0, %v615
        %v617 = vmul.f32 %v616, 2.1237322e-06
        %v618 = vadd.f32 %v617, 0.00028619796
        %v619 = vmul.f32 %v616, %v618
        %v620 = vadd.f32 %v619, 0.0036580483
        %v621 = vmul.f32 %v616, %v620
        %v622 = vadd.f32 %v621, 0.05243302
        %v623 = vmul.f32 %v616, %v622
        %v624 = vadd.f32 %v623, 0.18741608
        %v625 = vmul.f32 %v616, %v624
        %v626 = vadd.f32 %v625, 1.1283791
        %v627 = vmul.f32 %v443, %v626
        %v628 = vmul.f32 %v616, 3.8918573e-05
        %v629 = vadd.f32 %v628, 0.001143296
        %v630 = vmul.f32 %v616, %v629
        %v631 = vadd.f32 %v630, 0.014752088
        %v632 = vmul.f32 %v616, %v631
        %v633 = vadd.f32 %v632, 0.112945676
        %v634 = vmul.f32 %v616, %v633
        %v635 = vadd.f32 %v634, 0.4994258
        %v636 = vmul.f32 %v616, %v635
        %v637 = vadd.f32 %v636, 1.0
        %v638 = vrcp.pop %v637
        %v639 = vmul.f32 %v637, %v638
        %v640 = vsub.f32 1.0, %v639
        %v641 = vmul.f32 %v638, %v640
        %v642 = vadd.f32 %v638, %v641
        %vm643 = vweird.f32 %v637
        %vm644 = vweird.f32 %v638
        %vm645 = vmor %vm643, %vm644
        %v646 = vsel %vm645, %v638, %v642
        %v647 = vand.u32 2147483647, %v637
        %vm648 = vcmp.eq.f32.partialorder %v647, 8.507059e+37
        %v649 = vand.u32 %v637, 2147483648
        %v650 = vor.u32 1.1754944e-38, %v649
        %v651 = vsel %vm648, %v650, %v646
        %v652 = vmul.f32 %v627, %v651
        %v653 = vmin.f32 %v652, 1.0
        %v654 = vmax.f32 %v653, -1.0
        %v655 = vmul.f32 %v444, %v444
        %v656 = vmin.f32 16.0, %v655
        %v657 = vmul.f32 %v656, 2.1237322e-06
        %v658 = vadd.f32 %v657, 0.00028619796
        %v659 = vmul.f32 %v656, %v658
        %v660 = vadd.f32 %v659, 0.0036580483
        %v661 = vmul.f32 %v656, %v660
        %v662 = vadd.f32 %v661, 0.05243302
        %v663 = vmul.f32 %v656, %v662
        %v664 = vadd.f32 %v663, 0.18741608
        %v665 = vmul.f32 %v656, %v664
        %v666 = vadd.f32 %v665, 1.1283791
        %v667 = vmul.f32 %v444, %v666
        %v668 = vmul.f32 %v656, 3.8918573e-05
        %v669 = vadd.f32 %v668, 0.001143296
        %v670 = vmul.f32 %v656, %v669
        %v671 = vadd.f32 %v670, 0.014752088
        %v672 = vmul.f32 %v656, %v671
        %v673 = vadd.f32 %v672, 0.112945676
        %v674 = vmul.f32 %v656, %v673
        %v675 = vadd.f32 %v674, 0.4994258
        %v676 = vmul.f32 %v656, %v675
        %v677 = vadd.f32 %v676, 1.0
        %v678 = vrcp.pop %v677
        %v679 = vmul.f32 %v677, %v678
        %v680 = vsub.f32 1.0, %v679
        %v681 = vmul.f32 %v678, %v680
        %v682 = vadd.f32 %v678, %v681
        %vm683 = vweird.f32 %v677
        %vm684 = vweird.f32 %v678
        %vm685 = vmor %vm683, %vm684
        %v686 = vsel %vm685, %v678, %v682
        %v687 = vand.u32 2147483647, %v677
        %vm688 = vcmp.eq.f32.partialorder %v687, 8.507059e+37
        %v689 = vand.u32 %v677, 2147483648
        %v690 = vor.u32 1.1754944e-38, %v689
        %v691 = vsel %vm688, %v690, %v686
        %v692 = vmul.f32 %v667, %v691
        %v693 = vmin.f32 %v692, 1.0
        %v694 = vmax.f32 %v693, -1.0
        %v695 = vmul.f32 %v445, %v445
        %v696 = vmin.f32 16.0, %v695
        %v697 = vmul.f32 %v696, 2.1237322e-06
        %v698 = vadd.f32 %v697, 0.00028619796
        %v699 = vmul.f32 %v696, %v698
        %v700 = vadd.f32 %v699, 0.0036580483
        %v701 = vmul.f32 %v696, %v700
        %v702 = vadd.f32 %v701, 0.05243302
        %v703 = vmul.f32 %v696, %v702
        %v704 = vadd.f32 %v703, 0.18741608
        %v705 = vmul.f32 %v696, %v704
        %v706 = vadd.f32 %v705, 1.1283791
        %v707 = vmul.f32 %v445, %v706
        %v708 = vmul.f32 %v696, 3.8918573e-05
        %v709 = vadd.f32 %v708, 0.001143296
        %v710 = vmul.f32 %v696, %v709
        %v711 = vadd.f32 %v710, 0.014752088
        %v712 = vmul.f32 %v696, %v711
        %v713 = vadd.f32 %v712, 0.112945676
        %v714 = vmul.f32 %v696, %v713
        %v715 = vadd.f32 %v714, 0.4994258
        %v716 = vmul.f32 %v696, %v715
        %v717 = vadd.f32 %v716, 1.0
        %v718 = vrcp.pop %v717
        %v719 = vmul.f32 %v717, %v718
        %v720 = vsub.f32 1.0, %v719
        %v721 = vmul.f32 %v718, %v720
        %v722 = vadd.f32 %v718, %v721
        %vm723 = vweird.f32 %v717
        %vm724 = vweird.f32 %v718
        %vm725 = vmor %vm723, %vm724
        %v726 = vsel %vm725, %v718, %v722
        %v727 = vand.u32 2147483647, %v717
        %vm728 = vcmp.eq.f32.partialorder %v727, 8.507059e+37
        %v729 = vand.u32 %v717, 2147483648
        %v730 = vor.u32 1.1754944e-38, %v729
        %v731 = vsel %vm728, %v730, %v726
        %v732 = vmul.f32 %v707, %v731
        %v733 = vmin.f32 %v732, 1.0
        %v734 = vmax.f32 %v733, -1.0
        %v735 = vmul.f32 %v446, %v446
        %v736 = vmin.f32 16.0, %v735
        %v737 = vmul.f32 %v736, 2.1237322e-06
        %v738 = vadd.f32 %v737, 0.00028619796
        %v739 = vmul.f32 %v736, %v738
        %v740 = vadd.f32 %v739, 0.0036580483
        %v741 = vmul.f32 %v736, %v740
        %v742 = vadd.f32 %v741, 0.05243302
        %v743 = vmul.f32 %v736, %v742
        %v744 = vadd.f32 %v743, 0.18741608
        %v745 = vmul.f32 %v736, %v744
        %v746 = vadd.f32 %v745, 1.1283791
        %v747 = vmul.f32 %v446, %v746
        %v748 = vmul.f32 %v736, 3.8918573e-05
        %v749 = vadd.f32 %v748, 0.001143296
        %v750 = vmul.f32 %v736, %v749
        %v751 = vadd.f32 %v750, 0.014752088
        %v752 = vmul.f32 %v736, %v751
        %v753 = vadd.f32 %v752, 0.112945676
        %v754 = vmul.f32 %v736, %v753
        %v755 = vadd.f32 %v754, 0.4994258
        %v756 = vmul.f32 %v736, %v755
        %v757 = vadd.f32 %v756, 1.0
        %v758 = vrcp.pop %v757
        %v759 = vmul.f32 %v757, %v758
        %v760 = vsub.f32 1.0, %v759
        %v761 = vmul.f32 %v758, %v760
        %v762 = vadd.f32 %v758, %v761
        %vm763 = vweird.f32 %v757
        %vm764 = vweird.f32 %v758
        %vm765 = vmor %vm763, %vm764
        %v766 = vsel %vm765, %v758, %v762
        %v767 = vand.u32 2147483647, %v757
        %vm768 = vcmp.eq.f32.partialorder %v767, 8.507059e+37
        %v769 = vand.u32 %v757, 2147483648
        %v770 = vor.u32 1.1754944e-38, %v769
        %v771 = vsel %vm768, %v770, %v766
        %v772 = vmul.f32 %v747, %v771
        %v773 = vmin.f32 %v772, 1.0
        %v774 = vmax.f32 %v773, -1.0
        %v775 = vmul.f32 %v447, %v447
        %v776 = vmin.f32 16.0, %v775
        %v777 = vmul.f32 %v776, 2.1237322e-06
        %v778 = vadd.f32 %v777, 0.00028619796
        %v779 = vmul.f32 %v776, %v778
        %v780 = vadd.f32 %v779, 0.0036580483
        %v781 = vmul.f32 %v776, %v780
        %v782 = vadd.f32 %v781, 0.05243302
        %v783 = vmul.f32 %v776, %v782
        %v784 = vadd.f32 %v783, 0.18741608
        %v785 = vmul.f32 %v776, %v784
        %v786 = vadd.f32 %v785, 1.1283791
        %v787 = vmul.f32 %v447, %v786
        %v788 = vmul.f32 %v776, 3.8918573e-05
        %v789 = vadd.f32 %v788, 0.001143296
        %v790 = vmul.f32 %v776, %v789
        %v791 = vadd.f32 %v790, 0.014752088
        %v792 = vmul.f32 %v776, %v791
        %v793 = vadd.f32 %v792, 0.112945676
        %v794 = vmul.f32 %v776, %v793
        %v795 = vadd.f32 %v794, 0.4994258
        %v796 = vmul.f32 %v776, %v795
        %v797 = vadd.f32 %v796, 1.0
        %v798 = vrcp.pop %v797
        %v799 = vmul.f32 %v797, %v798
        %v800 = vsub.f32 1.0, %v799
        %v801 = vmul.f32 %v798, %v800
        %v802 = vadd.f32 %v798, %v801
        %vm803 = vweird.f32 %v797
        %vm804 = vweird.f32 %v798
        %vm805 = vmor %vm803, %vm804
        %v806 = vsel %vm805, %v798, %v802
        %v807 = vand.u32 2147483647, %v797
        %vm808 = vcmp.eq.f32.partialorder %v807, 8.507059e+37
        %v809 = vand.u32 %v797, 2147483648
        %v810 = vor.u32 1.1754944e-38, %v809
        %v811 = vsel %vm808, %v810, %v806
        %v812 = vmul.f32 %v787, %v811
        %v813 = vmin.f32 %v812, 1.0
        %v814 = vmax.f32 %v813, -1.0
        %v815 = vmul.f32 %v448, %v448
        %v816 = vmin.f32 16.0, %v815
        %v817 = vmul.f32 %v816, 2.1237322e-06
        %v818 = vadd.f32 %v817, 0.00028619796
        %v819 = vmul.f32 %v816, %v818
        %v820 = vadd.f32 %v819, 0.0036580483
        %v821 = vmul.f32 %v816, %v820
        %v822 = vadd.f32 %v821, 0.05243302
        %v823 = vmul.f32 %v816, %v822
        %v824 = vadd.f32 %v823, 0.18741608
        %v825 = vmul.f32 %v816, %v824
        %v826 = vadd.f32 %v825, 1.1283791
        %v827 = vmul.f32 %v448, %v826
        %v828 = vmul.f32 %v816, 3.8918573e-05
        %v829 = vadd.f32 %v828, 0.001143296
        %v830 = vmul.f32 %v816, %v829
        %v831 = vadd.f32 %v830, 0.014752088
        %v832 = vmul.f32 %v816, %v831
        %v833 = vadd.f32 %v832, 0.112945676
        %v834 = vmul.f32 %v816, %v833
        %v835 = vadd.f32 %v834, 0.4994258
        %v836 = vmul.f32 %v816, %v835
        %v837 = vadd.f32 %v836, 1.0
        %v838 = vrcp.pop %v837
        %v839 = vmul.f32 %v837, %v838
        %v840 = vsub.f32 1.0, %v839
        %v841 = vmul.f32 %v838, %v840
        %v842 = vadd.f32 %v838, %v841
        %vm843 = vweird.f32 %v837
        %vm844 = vweird.f32 %v838
        %vm845 = vmor %vm843, %vm844
        %v846 = vsel %vm845, %v838, %v842
        %v847 = vand.u32 2147483647, %v837
        %vm848 = vcmp.eq.f32.partialorder %v847, 8.507059e+37
        %v849 = vand.u32 %v837, 2147483648
        %v850 = vor.u32 1.1754944e-38, %v849
        %v851 = vsel %vm848, %v850, %v846
        %v852 = vmul.f32 %v827, %v851
        %v853 = vmin.f32 %v852, 1.0
        %v854 = vmax.f32 %v853, -1.0
        %v855 = vmul.f32 %v449, %v449
        %v856 = vmin.f32 16.0, %v855
        %v857 = vmul.f32 %v856, 2.1237322e-06
        %v858 = vadd.f32 %v857, 0.00028619796
        %v859 = vmul.f32 %v856, %v858
        %v860 = vadd.f32 %v859, 0.0036580483
        %v861 = vmul.f32 %v856, %v860
        %v862 = vadd.f32 %v861, 0.05243302
        %v863 = vmul.f32 %v856, %v862
        %v864 = vadd.f32 %v863, 0.18741608
        %v865 = vmul.f32 %v856, %v864
        %v866 = vadd.f32 %v865, 1.1283791
        %v867 = vmul.f32 %v449, %v866
        %v868 = vmul.f32 %v856, 3.8918573e-05
        %v869 = vadd.f32 %v868, 0.001143296
        %v870 = vmul.f32 %v856, %v869
        %v871 = vadd.f32 %v870, 0.014752088
        %v872 = vmul.f32 %v856, %v871
        %v873 = vadd.f32 %v872, 0.112945676
        %v874 = vmul.f32 %v856, %v873
        %v875 = vadd.f32 %v874, 0.4994258
        %v876 = vmul.f32 %v856, %v875
        %v877 = vadd.f32 %v876, 1.0
        %v878 = vrcp.pop %v877
        %v879 = vmul.f32 %v877, %v878
        %v880 = vsub.f32 1.0, %v879
        %v881 = vmul.f32 %v878, %v880
        %v882 = vadd.f32 %v878, %v881
        %vm883 = vweird.f32 %v877
        %vm884 = vweird.f32 %v878
        %vm885 = vmor %vm883, %vm884
        %v886 = vsel %vm885, %v878, %v882
        %v887 = vand.u32 2147483647, %v877
        %vm888 = vcmp.eq.f32.partialorder %v887, 8.507059e+37
        %v889 = vand.u32 %v877, 2147483648
        %v890 = vor.u32 1.1754944e-38, %v889
        %v891 = vsel %vm888, %v890, %v886
        %v892 = vmul.f32 %v867, %v891
        %v893 = vmin.f32 %v892, 1.0
        %v894 = vmax.f32 %v893, -1.0
        %v895 = vmul.f32 %v450, %v450
        %v896 = vmin.f32 16.0, %v895
        %v897 = vmul.f32 %v896, 2.1237322e-06
        %v898 = vadd.f32 %v897, 0.00028619796
        %v899 = vmul.f32 %v896, %v898
        %v900 = vadd.f32 %v899, 0.0036580483
        %v901 = vmul.f32 %v896, %v900
        %v902 = vadd.f32 %v901, 0.05243302
        %v903 = vmul.f32 %v896, %v902
        %v904 = vadd.f32 %v903, 0.18741608
        %v905 = vmul.f32 %v896, %v904
        %v906 = vadd.f32 %v905, 1.1283791
        %v907 = vmul.f32 %v450, %v906
        %v908 = vmul.f32 %v896, 3.8918573e-05
        %v909 = vadd.f32 %v908, 0.001143296
        %v910 = vmul.f32 %v896, %v909
        %v911 = vadd.f32 %v910, 0.014752088
        %v912 = vmul.f32 %v896, %v911
        %v913 = vadd.f32 %v912, 0.112945676
        %v914 = vmul.f32 %v896, %v913
        %v915 = vadd.f32 %v914, 0.4994258
        %v916 = vmul.f32 %v896, %v915
        %v917 = vadd.f32 %v916, 1.0
        %v918 = vrcp.pop %v917
        %v919 = vmul.f32 %v917, %v918
        %v920 = vsub.f32 1.0, %v919
        %v921 = vmul.f32 %v918, %v920
        %v922 = vadd.f32 %v918, %v921
        %vm923 = vweird.f32 %v917
        %vm924 = vweird.f32 %v918
        %vm925 = vmor %vm923, %vm924
        %v926 = vsel %vm925, %v918, %v922
        %v927 = vand.u32 2147483647, %v917
        %vm928 = vcmp.eq.f32.partialorder %v927, 8.507059e+37
        %v929 = vand.u32 %v917, 2147483648
        %v930 = vor.u32 1.1754944e-38, %v929
        %v931 = vsel %vm928, %v930, %v926
        %v932 = vmul.f32 %v907, %v931
        %v933 = vmin.f32 %v932, 1.0
        %v934 = vmax.f32 %v933, -1.0
        %v935 = vmul.f32 %v451, %v451
        %v936 = vmin.f32 16.0, %v935
        %v937 = vmul.f32 %v936, 2.1237322e-06
        %v938 = vadd.f32 %v937, 0.00028619796
        %v939 = vmul.f32 %v936, %v938
        %v940 = vadd.f32 %v939, 0.0036580483
        %v941 = vmul.f32 %v936, %v940
        %v942 = vadd.f32 %v941, 0.05243302
        %v943 = vmul.f32 %v936, %v942
        %v944 = vadd.f32 %v943, 0.18741608
        %v945 = vmul.f32 %v936, %v944
        %v946 = vadd.f32 %v945, 1.1283791
        %v947 = vmul.f32 %v451, %v946
        %v948 = vmul.f32 %v936, 3.8918573e-05
        %v949 = vadd.f32 %v948, 0.001143296
        %v950 = vmul.f32 %v936, %v949
        %v951 = vadd.f32 %v950, 0.014752088
        %v952 = vmul.f32 %v936, %v951
        %v953 = vadd.f32 %v952, 0.112945676
        %v954 = vmul.f32 %v936, %v953
        %v955 = vadd.f32 %v954, 0.4994258
        %v956 = vmul.f32 %v936, %v955
        %v957 = vadd.f32 %v956, 1.0
        %v958 = vrcp.pop %v957
        %v959 = vmul.f32 %v957, %v958
        %v960 = vsub.f32 1.0, %v959
        %v961 = vmul.f32 %v958, %v960
        %v962 = vadd.f32 %v958, %v961
        %vm963 = vweird.f32 %v957
        %vm964 = vweird.f32 %v958
        %vm965 = vmor %vm963, %vm964
        %v966 = vsel %vm965, %v958, %v962
        %v967 = vand.u32 2147483647, %v957
        %vm968 = vcmp.eq.f32.partialorder %v967, 8.507059e+37
        %v969 = vand.u32 %v957, 2147483648
        %v970 = vor.u32 1.1754944e-38, %v969
        %v971 = vsel %vm968, %v970, %v966
        %v972 = vmul.f32 %v947, %v971
        %v973 = vmin.f32 %v972, 1.0
        %v974 = vmax.f32 %v973, -1.0
        %v975 = vmul.f32 %v452, %v452
        %v976 = vmin.f32 16.0, %v975
        %v977 = vmul.f32 %v976, 2.1237322e-06
        %v978 = vadd.f32 %v977, 0.00028619796
        %v979 = vmul.f32 %v976, %v978
        %v980 = vadd.f32 %v979, 0.0036580483
        %v981 = vmul.f32 %v976, %v980
        %v982 = vadd.f32 %v981, 0.05243302
        %v983 = vmul.f32 %v976, %v982
        %v984 = vadd.f32 %v983, 0.18741608
        %v985 = vmul.f32 %v976, %v984
        %v986 = vadd.f32 %v985, 1.1283791
        %v987 = vmul.f32 %v452, %v986
        %v988 = vmul.f32 %v976, 3.8918573e-05
        %v989 = vadd.f32 %v988, 0.001143296
        %v990 = vmul.f32 %v976, %v989
        %v991 = vadd.f32 %v990, 0.014752088
        %v992 = vmul.f32 %v976, %v991
        %v993 = vadd.f32 %v992, 0.112945676
        %v994 = vmul.f32 %v976, %v993
        %v995 = vadd.f32 %v994, 0.4994258
        %v996 = vmul.f32 %v976, %v995
        %v997 = vadd.f32 %v996, 1.0
        %v998 = vrcp.pop %v997
        %v999 = vmul.f32 %v997, %v998
        %v1000 = vsub.f32 1.0, %v999
        %v1001 = vmul.f32 %v998, %v1000
        %v1002 = vadd.f32 %v998, %v1001
        %vm1003 = vweird.f32 %v997
        %vm1004 = vweird.f32 %v998
        %vm1005 = vmor %vm1003, %vm1004
        %v1006 = vsel %vm1005, %v998, %v1002
        %v1007 = vand.u32 2147483647, %v997
        %vm1008 = vcmp.eq.f32.partialorder %v1007, 8.507059e+37
        %v1009 = vand.u32 %v997, 2147483648
        %v1010 = vor.u32 1.1754944e-38, %v1009
        %v1011 = vsel %vm1008, %v1010, %v1006
        %v1012 = vmul.f32 %v987, %v1011
        %v1013 = vmin.f32 %v1012, 1.0
        %v1014 = vmax.f32 %v1013, -1.0
        %v1015 = vmul.f32 %v453, %v453
        %v1016 = vmin.f32 16.0, %v1015
        %v1017 = vmul.f32 %v1016, 2.1237322e-06
        %v1018 = vadd.f32 %v1017, 0.00028619796
        %v1019 = vmul.f32 %v1016, %v1018
        %v1020 = vadd.f32 %v1019, 0.0036580483
        %v1021 = vmul.f32 %v1016, %v1020
        %v1022 = vadd.f32 %v1021, 0.05243302
        %v1023 = vmul.f32 %v1016, %v1022
        %v1024 = vadd.f32 %v1023, 0.18741608
        %v1025 = vmul.f32 %v1016, %v1024
        %v1026 = vadd.f32 %v1025, 1.1283791
        %v1027 = vmul.f32 %v453, %v1026
        %v1028 = vmul.f32 %v1016, 3.8918573e-05
        %v1029 = vadd.f32 %v1028, 0.001143296
        %v1030 = vmul.f32 %v1016, %v1029
        %v1031 = vadd.f32 %v1030, 0.014752088
        %v1032 = vmul.f32 %v1016, %v1031
        %v1033 = vadd.f32 %v1032, 0.112945676
        %v1034 = vmul.f32 %v1016, %v1033
        %v1035 = vadd.f32 %v1034, 0.4994258
        %v1036 = vmul.f32 %v1016, %v1035
        %v1037 = vadd.f32 %v1036, 1.0
        %v1038 = vrcp.pop %v1037
        %v1039 = vmul.f32 %v1037, %v1038
        %v1040 = vsub.f32 1.0, %v1039
        %v1041 = vmul.f32 %v1038, %v1040
        %v1042 = vadd.f32 %v1038, %v1041
        %vm1043 = vweird.f32 %v1037
        %vm1044 = vweird.f32 %v1038
        %vm1045 = vmor %vm1043, %vm1044
        %v1046 = vsel %vm1045, %v1038, %v1042
        %v1047 = vand.u32 2147483647, %v1037
        %vm1048 = vcmp.eq.f32.partialorder %v1047, 8.507059e+37
        %v1049 = vand.u32 %v1037, 2147483648
        %v1050 = vor.u32 1.1754944e-38, %v1049
        %v1051 = vsel %vm1048, %v1050, %v1046
        %v1052 = vmul.f32 %v1027, %v1051
        %v1053 = vmin.f32 %v1052, 1.0
        %v1054 = vmax.f32 %v1053, -1.0
        %v1055 = vmul.f32 %v454, %v454
        %v1056 = vmin.f32 16.0, %v1055
        %v1057 = vmul.f32 %v1056, 2.1237322e-06
        %v1058 = vadd.f32 %v1057, 0.00028619796
        %v1059 = vmul.f32 %v1056, %v1058
        %v1060 = vadd.f32 %v1059, 0.0036580483
        %v1061 = vmul.f32 %v1056, %v1060
        %v1062 = vadd.f32 %v1061, 0.05243302
        %v1063 = vmul.f32 %v1056, %v1062
        %v1064 = vadd.f32 %v1063, 0.18741608
        %v1065 = vmul.f32 %v1056, %v1064
        %v1066 = vadd.f32 %v1065, 1.1283791
        %v1067 = vmul.f32 %v454, %v1066
        %v1068 = vmul.f32 %v1056, 3.8918573e-05
        %v1069 = vadd.f32 %v1068, 0.001143296
        %v1070 = vmul.f32 %v1056, %v1069
        %v1071 = vadd.f32 %v1070, 0.014752088
        %v1072 = vmul.f32 %v1056, %v1071
        %v1073 = vadd.f32 %v1072, 0.112945676
        %v1074 = vmul.f32 %v1056, %v1073
        %v1075 = vadd.f32 %v1074, 0.4994258
        %v1076 = vmul.f32 %v1056, %v1075
        %v1077 = vadd.f32 %v1076, 1.0
        %v1078 = vrcp.pop %v1077
        %v1079 = vmul.f32 %v1077, %v1078
        %v1080 = vsub.f32 1.0, %v1079
        %v1081 = vmul.f32 %v1078, %v1080
        %v1082 = vadd.f32 %v1078, %v1081
        %vm1083 = vweird.f32 %v1077
        %vm1084 = vweird.f32 %v1078
        %vm1085 = vmor %vm1083, %vm1084
        %v1086 = vsel %vm1085, %v1078, %v1082
        %v1087 = vand.u32 2147483647, %v1077
        %vm1088 = vcmp.eq.f32.partialorder %v1087, 8.507059e+37
        %v1089 = vand.u32 %v1077, 2147483648
        %v1090 = vor.u32 1.1754944e-38, %v1089
        %v1091 = vsel %vm1088, %v1090, %v1086
        %v1092 = vmul.f32 %v1067, %v1091
        %v1093 = vmin.f32 %v1092, 1.0
        %v1094 = vmax.f32 %v1093, -1.0
        %v1095 = vadd.f32 %v494, 1.0
        %v1096 = vadd.f32 %v534, 1.0
        %v1097 = vadd.f32 %v574, 1.0
        %v1098 = vadd.f32 %v614, 1.0
        %v1099 = vadd.f32 %v654, 1.0
        %v1100 = vadd.f32 %v694, 1.0
        %v1101 = vadd.f32 %v734, 1.0
        %v1102 = vadd.f32 %v774, 1.0
        %v1103 = vadd.f32 %v814, 1.0
        %v1104 = vadd.f32 %v854, 1.0
        %v1105 = vadd.f32 %v894, 1.0
        %v1106 = vadd.f32 %v934, 1.0
        %v1107 = vadd.f32 %v974, 1.0
        %v1108 = vadd.f32 %v1014, 1.0
        %v1109 = vadd.f32 %v1054, 1.0
        %v1110 = vadd.f32 %v1094, 1.0
        %v1111 = vmul.f32 %v423, %v1095
        %v1112 = vmul.f32 %v424, %v1096
        %v1113 = vmul.f32 %v425, %v1097
        %v1114 = vmul.f32 %v426, %v1098
        %v1115 = vmul.f32 %v427, %v1099
        %v1116 = vmul.f32 %v428, %v1100
        %v1117 = vmul.f32 %v429, %v1101
        %v1118 = vmul.f32 %v430, %v1102
        %v1119 = vmul.f32 %v431, %v1103
        %v1120 = vmul.f32 %v432, %v1104
        %v1121 = vmul.f32 %v433, %v1105
        %v1122 = vmul.f32 %v434, %v1106
        %v1123 = vmul.f32 %v435, %v1107
        %v1124 = vmul.f32 %v436, %v1108
        %v1125 = vmul.f32 %v437, %v1109
        %v1126 = vmul.f32 %v438, %v1110
        %v1127 = vld [vmem:[#allocation8] sm:$0xff]
        %v1128 = vld [vmem:[#allocation8 + $0x8] sm:$0xff]
        %v1129 = vld [vmem:[#allocation8 + $0x10] sm:$0xff]
        %v1130 = vld [vmem:[#allocation8 + $0x18] sm:$0xff]
        %v1131 = vld [vmem:[#allocation8 + $0x20] sm:$0xff]
        %v1132 = vld [vmem:[#allocation8 + $0x28] sm:$0xff]
        %v1133 = vld [vmem:[#allocation8 + $0x30] sm:$0xff]
        %v1134 = vld [vmem:[#allocation8 + $0x38] sm:$0xff]
        %v1135 = vld [vmem:[#allocation8 + $0x40] sm:$0xff]
        %v1136 = vld [vmem:[#allocation8 + $0x48] sm:$0xff]
        %v1137 = vld [vmem:[#allocation8 + $0x50] sm:$0xff]
        %v1138 = vld [vmem:[#allocation8 + $0x58] sm:$0xff]
        %v1139 = vld [vmem:[#allocation8 + $0x60] sm:$0xff]
        %v1140 = vld [vmem:[#allocation8 + $0x68] sm:$0xff]
        %v1141 = vld [vmem:[#allocation8 + $0x70] sm:$0xff]
        %v1142 = vld [vmem:[#allocation8 + $0x78] sm:$0xff]
        %v1143 = vld [vmem:[#allocation8 + $0x80] sm:$0xff]
        %v1144 = vld [vmem:[#allocation8 + $0x88] sm:$0xff]
        %v1145 = vld [vmem:[#allocation8 + $0x90] sm:$0xff]
        %v1146 = vld [vmem:[#allocation8 + $0x98] sm:$0xff]
        %v1147 = vld [vmem:[#allocation8 + $0xa0] sm:$0xff]
        %v1148 = vld [vmem:[#allocation8 + $0xa8] sm:$0xff]
        %v1149 = vld [vmem:[#allocation8 + $0xb0] sm:$0xff]
        %v1150 = vld [vmem:[#allocation8 + $0xb8] sm:$0xff]
        %v1151 = vld [vmem:[#allocation8 + $0xc0] sm:$0xff]
        %v1152 = vld [vmem:[#allocation8 + $0xc8] sm:$0xff]
        %v1153 = vld [vmem:[#allocation8 + $0xd0] sm:$0xff]
        %v1154 = vld [vmem:[#allocation8 + $0xd8] sm:$0xff]
        %v1155 = vld [vmem:[#allocation8 + $0xe0] sm:$0xff]
        %v1156 = vld [vmem:[#allocation8 + $0xe8] sm:$0xff]
        %v1157 = vld [vmem:[#allocation8 + $0xf0] sm:$0xff]
        %v1158 = vld [vmem:[#allocation8 + $0xf8] sm:$0xff]
        %v1159 = vld [vmem:[%s4] sm:$0x1]
        %v1161 = vperm.slane %v1159, 0
        %1163 = vmatpush.msra.mxu0 %v1142
        %1164 = vmatpush.msra.mxu0 %v1141
        %1165 = vmatpush.msra.mxu0 %v1140
        %1166 = vmatpush.msra.mxu0 %v1139
        %1167 = vmatpush.msra.mxu0 %v1138
        %1168 = vmatpush.msra.mxu0 %v1137
        %1169 = vmatpush.msra.mxu0 %v1136
        %1170 = vmatpush.msra.mxu0 %v1135
        %1171 = vmatpush.msra.mxu0 %v1134
        %1172 = vmatpush.msra.mxu0 %v1133
        %1173 = vmatpush.msra.mxu0 %v1132
        %1174 = vmatpush.msra.mxu0 %v1131
        %1175 = vmatpush.msra.mxu0 %v1130
        %1176 = vmatpush.msra.mxu0 %v1129
        %1177 = vmatpush.msra.mxu0 %v1128
        %1178 = vmatpush.msra.mxu0 %v1127
        %1179 = vmatmul.f32.gmra.mxu0 %v1111
        %v1180 = vpop.f32.mrf.mxu0
        %v1181 = vadd.f32 %v1161, %v1180
        %1182 = vmatmul.f32.gmra.mxu0 %v1113
        %v1183 = vpop.f32.mrf.mxu0
        %v1184 = vadd.f32 %v1161, %v1183
        %1185 = vmatmul.f32.gmra.mxu0 %v1115
        %v1186 = vpop.f32.mrf.mxu0
        %v1187 = vadd.f32 %v1161, %v1186
        %1188 = vmatmul.f32.gmra.mxu0 %v1117
        %v1189 = vpop.f32.mrf.mxu0
        %v1190 = vadd.f32 %v1161, %v1189
        %1191 = vmatmul.f32.gmra.mxu0 %v1119
        %v1192 = vpop.f32.mrf.mxu0
        %v1193 = vadd.f32 %v1161, %v1192
        %1194 = vmatmul.f32.gmra.mxu0 %v1121
        %v1195 = vpop.f32.mrf.mxu0
        %v1196 = vadd.f32 %v1161, %v1195
        %1197 = vmatmul.f32.gmra.mxu0 %v1123
        %v1198 = vpop.f32.mrf.mxu0
        %v1199 = vadd.f32 %v1161, %v1198
        %1200 = vmatmul.f32.gmra.mxu0 %v1125
        %v1201 = vpop.f32.mrf.mxu0
        %v1202 = vadd.f32 %v1161, %v1201
        %1203 = vdwg.mxu0
        %1204 = vmatpush.msra.mxu0 %v1158
        %1205 = vmatpush.msra.mxu0 %v1157
        %1206 = vmatpush.msra.mxu0 %v1156
        %1207 = vmatpush.msra.mxu0 %v1155
        %1208 = vmatpush.msra.mxu0 %v1154
        %1209 = vmatpush.msra.mxu0 %v1153
        %1210 = vmatpush.msra.mxu0 %v1152
        %1211 = vmatpush.msra.mxu0 %v1151
        %1212 = vmatpush.msra.mxu0 %v1150
        %1213 = vmatpush.msra.mxu0 %v1149
        %1214 = vmatpush.msra.mxu0 %v1148
        %1215 = vmatpush.msra.mxu0 %v1147
        %1216 = vmatpush.msra.mxu0 %v1146
        %1217 = vmatpush.msra.mxu0 %v1145
        %1218 = vmatpush.msra.mxu0 %v1144
        %1219 = vmatpush.msra.mxu0 %v1143
        %1220 = vmatmul.f32.gmra.mxu0 %v1112
        %v1221 = vpop.f32.mrf.mxu0
        %v1222 = vadd.f32 %v1181, %v1221
        %1223 = vmatmul.f32.gmra.mxu0 %v1114
        %v1224 = vpop.f32.mrf.mxu0
        %v1225 = vadd.f32 %v1184, %v1224
        %1226 = vmatmul.f32.gmra.mxu0 %v1116
        %v1227 = vpop.f32.mrf.mxu0
        %v1228 = vadd.f32 %v1187, %v1227
        %1229 = vmatmul.f32.gmra.mxu0 %v1118
        %v1230 = vpop.f32.mrf.mxu0
        %v1231 = vadd.f32 %v1190, %v1230
        %1232 = vmatmul.f32.gmra.mxu0 %v1120
        %v1233 = vpop.f32.mrf.mxu0
        %v1234 = vadd.f32 %v1193, %v1233
        %1235 = vmatmul.f32.gmra.mxu0 %v1122
        %v1236 = vpop.f32.mrf.mxu0
        %v1237 = vadd.f32 %v1196, %v1236
        %1238 = vmatmul.f32.gmra.mxu0 %v1124
        %v1239 = vpop.f32.mrf.mxu0
        %v1240 = vadd.f32 %v1199, %v1239
        %1241 = vmatmul.f32.gmra.mxu0 %v1126
        %v1242 = vpop.f32.mrf.mxu0
        %v1243 = vadd.f32 %v1202, %v1242
        %1244 = vdwg.mxu0
        %1245 = vst [vmem:[%s292] sm:$0xff] %v1222
        %1246 = vst [vmem:[%s292 + $0x8] sm:$0xff] %v1225
        %1247 = vst [vmem:[%s292 + $0x10] sm:$0xff] %v1228
        %1248 = vst [vmem:[%s292 + $0x18] sm:$0xff] %v1231
        %1249 = vst [vmem:[%s292 + $0x20] sm:$0xff] %v1234
        %1250 = vst [vmem:[%s292 + $0x28] sm:$0xff] %v1237
        %1251 = vst [vmem:[%s292 + $0x30] sm:$0xff] %v1240
        %1252 = vst [vmem:[%s292 + $0x38] sm:$0xff] %v1243
        %s1253 = sand.u32 %s142, 1
        %s1254 = scalar_lea.sflag [#allocation4], %s1253
        %s1255 = sand.u32 %s142, 1
        %s1256 = smul.addr %s1255, 64
        %s1257 = scalar_lea.vmem [#allocation10], %s1256
        // Predicated region
        $region57: #{tpu_custom_call.1} parent=39 // pred_check
          %p1258 = pneg %p152
        $region58: #{tpu_custom_call.1} parent=39 // pred_check_branch
          %1260 = sbr.rel (%p1258) target = $region60
        $region59: #{tpu_custom_call.1} parent=39 // pred_region
          %s1261 = smul.u32 8, %s24
          %1263 = vsyncadd %s1254, 0
          %s1264 = smul.addr %s1261, 8
          %s1265 = scalar_lea.hbm %s5, %s1264
          %s1266 = sshll.u32 %s1257, 4
          %s1267 = int_to_ptr.vmem [resolvable:$true] %s1266
          %s1268 = sshll.u32 %s1265, 4
          %s1269 = int_to_ptr.hbm [resolvable:$true] %s1268
          %1274 = dma.vmem_to_hbm [thread:$0]  %s1267, 1024, %s1269, %s1254, 128, 128, 8
        $region60: #{tpu_custom_call.1} parent=39 // pred_fallthru
          _
      $region40: #{tpu_custom_call.1} parent=5 // pred_fallthru
        _
      %p1275 = scmp.le.s32.totalorder 2, %s19
      // Predicated region
      $region61: #{tpu_custom_call.1} parent=5 // pred_check
        %p1276 = pneg %p1275
      $region62: #{tpu_custom_call.1} parent=5 // pred_check_branch
        %1278 = sbr.rel (%p1276) target = $region64
      $region63: #{tpu_custom_call.1} parent=5 // pred_region
        %s1279 = ssub.s32 %s19, 2
        // Predicated region
        $region65: #{tpu_custom_call.1} parent=63 // pred_check
          %p1280 = pneg %p158
        $region66: #{tpu_custom_call.1} parent=63 // pred_check_branch
          %1282 = sbr.rel (%p1280) target = $region68
        $region67: #{tpu_custom_call.1} parent=63 // pred_region
          %s1283 = sand.u32 %s143, 1
          %s1284 = scalar_lea.sflag [#allocation4], %s1283
          %s1285 = sand.u32 %s143, 1
          %s1286 = smul.addr %s1285, 64
          %s1287 = scalar_lea.vmem [#allocation10], %s1286
          %1289 = dma.done %s1284, 1024
        $region68: #{tpu_custom_call.1} parent=63 // pred_fallthru
          _
      $region64: #{tpu_custom_call.1} parent=5 // pred_fallthru
        _
    $region6: #{tpu_custom_call.1} parent=1 // loop_footer
      %s23 = sadd.s32 1, %s19
    $region7: #{tpu_custom_call.1} parent=1 // loop_footer_branch
      %18 = sbr.rel target = $region3
    $region8: #{tpu_custom_call.1} parent=1 // loop_exit
      _
    %1290 = vsyncpa [#allocation3], 1
    %s1291 = scalar_lea.sflag [#allocation3], 1
    %1292 = vsyncpa %s1291, 1
    %1293 = vsyncpa [#allocation6], 1
    %1294 = vsyncpa [#allocation9], 1
    %1295 = vsyncpa [#allocation4], 1
    %s1296 = scalar_lea.sflag [#allocation4], 1
    %1297 = vsyncpa %s1296, 1

</llo_original>
